<compile_context>
chip_gen: v7x
topology: tpu7x:2x2x1
jax: 0.10.0
libtpu: 0.0.40
codegen_flags: <defaults>
</compile_context>

<pallas_src>
import jax
import jax.numpy as jnp
from jax.experimental import pallas as pl
from jax.experimental.pallas import tpu as pltpu

_LANES = 128
_SUBLANES = 8


def mlp_kernel(x_ref, w1_ref, b1_ref, w2_ref, b2_ref, o_ref):
    x = x_ref[...]          # (TM, in_dim)          in_dim = 2
    w1 = w1_ref[...]        # (in_dim, HPAD)        HPAD = 128 (lane-padded)
    w2 = w2_ref[...]        # (hid,    OPAD)        hid = 4, OPAD = 128
    tm = x.shape[0]
    in_dim = w1.shape[0]
    hid = w2.shape[0]

    # ---- Layer 1: hidden = sigmoid(x @ W1 + b1), VPU FMAs over K = in_dim ----
    acc1 = jnp.broadcast_to(b1_ref[...], (tm, w1.shape[1]))
    for k in range(in_dim):                       # static, fully unrolled (K = 2)
        acc1 = acc1 + x[:, k:k + 1] * w1[k:k + 1, :]
    h = jax.nn.sigmoid(acc1)                      # (TM, HPAD)  -- EUP

    # ---- Layer 2: out = sigmoid(h @ W2 + b2), VPU FMAs over hid rows ----
    acc2 = jnp.broadcast_to(b2_ref[...], (tm, w2.shape[1]))
    for j in range(hid):                          # static, fully unrolled (hid = 4)
        acc2 = acc2 + h[:, j:j + 1] * w2[j:j + 1, :]

    # Lane-dense (TM, 128) store; wrapper slices out the real output column(s).
    o_ref[...] = jax.nn.sigmoid(acc2).astype(o_ref.dtype)


def mlptorch_forward(x, w1, b1, w2, b2, *, tile_m=1024):
    """x: (batch, 2); w1: (2, 4); b1: (1, 4) or (4,); w2: (4, 1); b2: (1, 1) or (1,)."""
    batch, in_dim = x.shape
    hid = w1.shape[1]
    out_dim = w2.shape[1]

    hpad = pl.cdiv(hid, _LANES) * _LANES          # 128
    opad = pl.cdiv(out_dim, _LANES) * _LANES      # 128

    # Zero-pad parameters to lane-dense layouts (padded lanes never influence
    # the real output columns: padded W2 columns only feed sliced-away lanes,
    # and layer 2 only reads the first `hid` hidden lanes).
    w1p = jnp.zeros((in_dim, hpad), jnp.float32).at[:, :hid].set(w1)
    b1p = jnp.zeros((1, hpad), jnp.float32).at[:, :hid].set(b1.reshape(1, hid))
    w2p = jnp.zeros((hid, opad), jnp.float32).at[:, :out_dim].set(w2)
    b2p = jnp.zeros((1, opad), jnp.float32).at[:, :out_dim].set(
        b2.reshape(1, out_dim))

    xf = x.astype(jnp.float32)

    if batch <= tile_m:
        # Gridless path: everything is a full-array VMEM block, read once,
        # no pipelining machinery.
        vmem = pl.BlockSpec(memory_space=pltpu.MemorySpace.VMEM)
        out = pl.pallas_call(
            mlp_kernel,
            out_shape=jax.ShapeDtypeStruct((batch, opad), jnp.float32),
            in_specs=[vmem] * 5,
            out_specs=vmem,
        )(xf, w1p, b1p, w2p, b2p)
    else:
        # Batch-tiled path.  The grid may be ragged (batch not a multiple of
        # tile_m): Pallas masks the partial final block's writeback, so no
        # padded HBM copy of x is needed.  Weights/biases stay VMEM-resident.
        tile_m = max(_SUBLANES, (tile_m // _SUBLANES) * _SUBLANES)
        nb = pl.cdiv(batch, tile_m)
        out = pl.pallas_call(
            mlp_kernel,
            out_shape=jax.ShapeDtypeStruct((batch, opad), jnp.float32),
            grid=(nb,),
            in_specs=[
                pl.BlockSpec((tile_m, in_dim), lambda i: (i, 0)),
                pl.BlockSpec((in_dim, hpad), lambda i: (0, 0)),
                pl.BlockSpec((1, hpad), lambda i: (0, 0)),
                pl.BlockSpec((hid, opad), lambda i: (0, 0)),
                pl.BlockSpec((1, opad), lambda i: (0, 0)),
            ],
            out_specs=pl.BlockSpec((tile_m, opad), lambda i: (i, 0)),
            compiler_params=pltpu.CompilerParams(
                dimension_semantics=("parallel",)),  # lets v7x use both TCs
        )(xf, w1p, b1p, w2p, b2p)

    return out[:, :out_dim]


def reference_forward(x, w1, b1, w2, b2):
    h = jax.nn.sigmoid(x @ w1 + b1)
    return jax.nn.sigmoid(h @ w2 + b2)


if __name__ == "__main__":
    key = jax.random.PRNGKey(0)
    k_x, k_w1, k_b1, k_w2, k_b2, k_big = jax.random.split(key, 6)

    batch, in_dim, hid_dim, out_dim = 8, 2, 4, 1

    x = jax.random.normal(k_x, (batch, in_dim), dtype=jnp.float32)
    # PyTorch nn.Linear weight layout is (out, in); we store the transpose.
    w1 = jax.random.normal(k_w1, (in_dim, hid_dim), dtype=jnp.float32) * 0.5
    b1 = jax.random.normal(k_b1, (1, hid_dim), dtype=jnp.float32) * 0.1
    w2 = jax.random.normal(k_w2, (hid_dim, out_dim), dtype=jnp.float32) * 0.5
    b2 = jax.random.normal(k_b2, (1, out_dim), dtype=jnp.float32) * 0.1

    # --- small batch: gridless path ---
    out = mlptorch_forward(x, w1, b1, w2, b2)
    jax.block_until_ready(out)
    ref = reference_forward(x, w1, b1, w2, b2)
    assert out.shape == (batch, out_dim), out.shape
    assert jnp.allclose(out, ref, atol=1e-5, rtol=1e-5), (out, ref)

    # --- larger batch: batch-tiled ("parallel") path with a ragged grid ---
    big_batch = 600
    xb = jax.random.normal(k_big, (big_batch, in_dim), dtype=jnp.float32)
    out_b = mlptorch_forward(xb, w1, b1, w2, b2, tile_m=256)
    jax.block_until_ready(out_b)
    ref_b = reference_forward(xb, w1, b1, w2, b2)
    assert out_b.shape == (big_batch, out_dim), out_b.shape
    assert jnp.allclose(out_b, ref_b, atol=1e-5, rtol=1e-5)

    print("KERNEL_OK")
</pallas_src>

<mosaic_0001>
module attributes {stable_mosaic.version = 11 : i64} {
  func.func @mlp_kernel(%arg0: memref<8x2xf32, #tpu.memory_space<vmem>>, %arg1: memref<2x128xf32, #tpu.memory_space<vmem>>, %arg2: memref<1x128xf32, #tpu.memory_space<vmem>>, %arg3: memref<4x128xf32, #tpu.memory_space<vmem>>, %arg4: memref<1x128xf32, #tpu.memory_space<vmem>>, %arg5: memref<8x128xf32, #tpu.memory_space<vmem>>) attributes {dimension_semantics = [], scalar_prefetch = 0 : i64, scratch_operands = 0 : i64, tpu.core_type = #tpu.core_type<tc>} {
    %c0 = arith.constant 0 : index
    %c0_0 = arith.constant 0 : index
    %0 = vector.load %arg0[%c0, %c0_0] : memref<8x2xf32, #tpu.memory_space<vmem>>, vector<8x2xf32>
    %c0_1 = arith.constant 0 : index
    %c0_2 = arith.constant 0 : index
    %1 = vector.load %arg1[%c0_1, %c0_2] : memref<2x128xf32, #tpu.memory_space<vmem>>, vector<2x128xf32>
    %c0_3 = arith.constant 0 : index
    %c0_4 = arith.constant 0 : index
    %2 = vector.load %arg3[%c0_3, %c0_4] : memref<4x128xf32, #tpu.memory_space<vmem>>, vector<4x128xf32>
    %c0_5 = arith.constant 0 : index
    %c0_6 = arith.constant 0 : index
    %3 = vector.load %arg2[%c0_5, %c0_6] : memref<1x128xf32, #tpu.memory_space<vmem>>, vector<1x128xf32>
    %4 = vector.shape_cast %3 : vector<1x128xf32> to vector<1x128xf32>
    %5 = vector.broadcast %4 : vector<1x128xf32> to vector<8x128xf32>
    %6 = vector.extract_strided_slice %0 {offsets = [0, 0], sizes = [8, 1], strides = [1, 1]} : vector<8x2xf32> to vector<8x1xf32>
    %7 = vector.extract_strided_slice %1 {offsets = [0, 0], sizes = [1, 128], strides = [1, 1]} : vector<2x128xf32> to vector<1x128xf32>
    %8 = vector.broadcast %6 : vector<8x1xf32> to vector<8x128xf32>
    %9 = vector.broadcast %7 : vector<1x128xf32> to vector<8x128xf32>
    %10 = arith.mulf %8, %9 : vector<8x128xf32>
    %11 = arith.addf %5, %10 : vector<8x128xf32>
    %12 = vector.extract_strided_slice %0 {offsets = [0, 1], sizes = [8, 1], strides = [1, 1]} : vector<8x2xf32> to vector<8x1xf32>
    %13 = vector.extract_strided_slice %1 {offsets = [1, 0], sizes = [1, 128], strides = [1, 1]} : vector<2x128xf32> to vector<1x128xf32>
    %14 = vector.broadcast %12 : vector<8x1xf32> to vector<8x128xf32>
    %15 = vector.broadcast %13 : vector<1x128xf32> to vector<8x128xf32>
    %16 = arith.mulf %14, %15 : vector<8x128xf32>
    %17 = arith.addf %11, %16 : vector<8x128xf32>
    %18 = arith.negf %17 : vector<8x128xf32>
    %19 = math.exp %18 : vector<8x128xf32>
    %cst = arith.constant 1.000000e+00 : f32
    %20 = vector.broadcast %cst : f32 to vector<8x128xf32>
    %21 = arith.addf %20, %19 : vector<8x128xf32>
    %22 = arith.divf %20, %21 : vector<8x128xf32>
    %c0_7 = arith.constant 0 : index
    %c0_8 = arith.constant 0 : index
    %23 = vector.load %arg4[%c0_7, %c0_8] : memref<1x128xf32, #tpu.memory_space<vmem>>, vector<1x128xf32>
    %24 = vector.shape_cast %23 : vector<1x128xf32> to vector<1x128xf32>
    %25 = vector.broadcast %24 : vector<1x128xf32> to vector<8x128xf32>
    %26 = vector.extract_strided_slice %22 {offsets = [0, 0], sizes = [8, 1], strides = [1, 1]} : vector<8x128xf32> to vector<8x1xf32>
    %27 = vector.extract_strided_slice %2 {offsets = [0, 0], sizes = [1, 128], strides = [1, 1]} : vector<4x128xf32> to vector<1x128xf32>
    %28 = vector.broadcast %26 : vector<8x1xf32> to vector<8x128xf32>
    %29 = vector.broadcast %27 : vector<1x128xf32> to vector<8x128xf32>
    %30 = arith.mulf %28, %29 : vector<8x128xf32>
    %31 = arith.addf %25, %30 : vector<8x128xf32>
    %32 = vector.extract_strided_slice %22 {offsets = [0, 1], sizes = [8, 1], strides = [1, 1]} : vector<8x128xf32> to vector<8x1xf32>
    %33 = vector.extract_strided_slice %2 {offsets = [1, 0], sizes = [1, 128], strides = [1, 1]} : vector<4x128xf32> to vector<1x128xf32>
    %34 = vector.broadcast %32 : vector<8x1xf32> to vector<8x128xf32>
    %35 = vector.broadcast %33 : vector<1x128xf32> to vector<8x128xf32>
    %36 = arith.mulf %34, %35 : vector<8x128xf32>
    %37 = arith.addf %31, %36 : vector<8x128xf32>
    %38 = vector.extract_strided_slice %22 {offsets = [0, 2], sizes = [8, 1], strides = [1, 1]} : vector<8x128xf32> to vector<8x1xf32>
    %39 = vector.extract_strided_slice %2 {offsets = [2, 0], sizes = [1, 128], strides = [1, 1]} : vector<4x128xf32> to vector<1x128xf32>
    %40 = vector.broadcast %38 : vector<8x1xf32> to vector<8x128xf32>
    %41 = vector.broadcast %39 : vector<1x128xf32> to vector<8x128xf32>
    %42 = arith.mulf %40, %41 : vector<8x128xf32>
    %43 = arith.addf %37, %42 : vector<8x128xf32>
    %44 = vector.extract_strided_slice %22 {offsets = [0, 3], sizes = [8, 1], strides = [1, 1]} : vector<8x128xf32> to vector<8x1xf32>
    %45 = vector.extract_strided_slice %2 {offsets = [3, 0], sizes = [1, 128], strides = [1, 1]} : vector<4x128xf32> to vector<1x128xf32>
    %46 = vector.broadcast %44 : vector<8x1xf32> to vector<8x128xf32>
    %47 = vector.broadcast %45 : vector<1x128xf32> to vector<8x128xf32>
    %48 = arith.mulf %46, %47 : vector<8x128xf32>
    %49 = arith.addf %43, %48 : vector<8x128xf32>
    %50 = arith.negf %49 : vector<8x128xf32>
    %51 = math.exp %50 : vector<8x128xf32>
    %cst_9 = arith.constant 1.000000e+00 : f32
    %52 = vector.broadcast %cst_9 : f32 to vector<8x128xf32>
    %53 = arith.addf %52, %51 : vector<8x128xf32>
    %54 = arith.divf %52, %53 : vector<8x128xf32>
    %c0_10 = arith.constant 0 : index
    %c0_11 = arith.constant 0 : index
    %55 = vector.load %arg5[%c0_10, %c0_11] : memref<8x128xf32, #tpu.memory_space<vmem>>, vector<8x128xf32>
    tpu.vector_store %arg5[%c0_10, %c0_11], %54 {strides = array<i32>} : memref<8x128xf32, #tpu.memory_space<vmem>>, vector<8x128xf32>,
    return
  }
}

</mosaic_0001>

<llo_original>
// kernel: tpu_custom_call.1
$region0: #{tpu_custom_call.1}
  #allocation0 [shape = 'u32[]', space=smem, size = 0x4, offset = 0x4, fixed_abs, tag = 'smem constant byte address 0x4 - core index']
  #allocation1 [shape = 'u32[144,128]{1,0:T(1,128)}', space=vmem, size = 0x12000, scoped, tag = 'internal scratch']
  %s0 = inlined_call_operand.vmem [shape: f32[8,2], index: 0, kind: input, shape index: {}]
  %s1 = inlined_call_operand.vmem [shape: f32[2,128], index: 1, kind: input, shape index: {}]
  %s2 = inlined_call_operand.vmem [shape: f32[1,128], index: 2, kind: input, shape index: {}]
  %s3 = inlined_call_operand.vmem [shape: f32[4,128], index: 3, kind: input, shape index: {}]
  %s4 = inlined_call_operand.vmem [shape: f32[1,128], index: 4, kind: input, shape index: {}]
  %s5 = inlined_call_operand.hbm [shape: f32[8,128], index: 5, kind: output, shape index: {}]
  %s6 = sld [smem:[#allocation0]]
  $region30: #{tpu_custom_call.1} parent=0
    _
  %s8 = ssub.s32 1, %s6
  %s9 = scalar_select 0, %s8, %s6
  $region1: #{tpu_custom_call.1} parent=0
    #allocation2 [shape = 'u8[4096]{0}', space=vmem, size = 0x1000, scoped, tag = 'output window, operand 0, single buffered']
    #allocation3 [shape = 's32[1]{0}', space=sflag, size = 0x4, scoped, tag = 'scoped memory for tpu_custom_call.1']
    %10 = vsyncpa [#allocation3], 0
    // Predicated region
    $region2: #{tpu_custom_call.1} parent=1 // pred_check
      _
    $region3: #{tpu_custom_call.1} parent=1 // pred_check_branch
      %12 = sbr.rel (0) target = $region5
    $region4: #{tpu_custom_call.1} parent=1 // pred_region
      _
    $region5: #{tpu_custom_call.1} parent=1 // pred_fallthru
      _
    // Predicated region
    $region6: #{tpu_custom_call.1} parent=1 // pred_check
      _
    $region7: #{tpu_custom_call.1} parent=1 // pred_check_branch
      %14 = sbr.rel (0) target = $region9
    $region8: #{tpu_custom_call.1} parent=1 // pred_region
      _
    $region9: #{tpu_custom_call.1} parent=1 // pred_fallthru
      _
    // Predicated region
    $region10: #{tpu_custom_call.1} parent=1 // pred_check
      _
    $region11: #{tpu_custom_call.1} parent=1 // pred_check_branch
      %16 = sbr.rel (0) target = $region13
    $region12: #{tpu_custom_call.1} parent=1 // pred_region
      _
    $region13: #{tpu_custom_call.1} parent=1 // pred_fallthru
      _
    // Predicated region
    $region14: #{tpu_custom_call.1} parent=1 // pred_check
      _
    $region15: #{tpu_custom_call.1} parent=1 // pred_check_branch
      %18 = sbr.rel (0) target = $region17
    $region16: #{tpu_custom_call.1} parent=1 // pred_region
      _
    $region17: #{tpu_custom_call.1} parent=1 // pred_fallthru
      _
    // Predicated region
    $region18: #{tpu_custom_call.1} parent=1 // pred_check
      _
    $region19: #{tpu_custom_call.1} parent=1 // pred_check_branch
      %20 = sbr.rel (0) target = $region21
    $region20: #{tpu_custom_call.1} parent=1 // pred_region
      _
    $region21: #{tpu_custom_call.1} parent=1 // pred_fallthru
      _
    %v21 = vld [vmem:[%s0] sm:$0xff]
    %v22 = vld [vmem:[%s1] sm:$0x3]
    %v23 = vld [vmem:[%s3] sm:$0xf]
    %v24 = vld [vmem:[%s2] sm:$0x1]
    %v26 = vlaneseq
    %v27 = vshrl.u32 %v26, 7
    %v28 = vsub.s32 0, %v27
    %v29 = vrot.slane %v24, %v28
    %32 = vset.pattern.permute.xlu0 0
    %33 = vperm.xlu0 %32, %v21
    %v34 = vpop.permute.xlu0 %33
    %v36 = vlaneseq
    %v37 = vshrl.u32 %v36, 7
    %v38 = vsub.s32 0, %v37
    %v39 = vrot.slane %v22, %v38
    %v40 = vmul.f32 %v34, %v39
    %v41 = vadd.f32 %v29, %v40
    %42 = vset.pattern.permute.xlu0 1
    %43 = vperm.xlu0 %42, %v21
    %v44 = vpop.permute.xlu0 %43
    %v46 = vlaneseq
    %v47 = vshrl.u32 %v46, 7
    %v48 = vsub.s32 1, %v47
    %v49 = vrot.slane %v22, %v48
    %v50 = vmul.f32 %v44, %v49
    %v51 = vadd.f32 %v41, %v50
    %v52 = vxor.u32 %v51, 2147483648
    %v53 = vmul.f32 %v52, 1.442695
    %v54 = vpow.pop %v53
    %v55 = vadd.f32 %v54, 1.0
    %v56 = vrcp.pop %v55
    %v57 = vmul.f32 1.0, %v56
    %v58 = vld [vmem:[%s4] sm:$0x1]
    %v60 = vlaneseq
    %v61 = vshrl.u32 %v60, 7
    %v62 = vsub.s32 0, %v61
    %v63 = vrot.slane %v58, %v62
    %66 = vset.pattern.permute.xlu0 0
    %67 = vperm.xlu0 %66, %v57
    %v68 = vpop.permute.xlu0 %67
    %v70 = vlaneseq
    %v71 = vshrl.u32 %v70, 7
    %v72 = vsub.s32 0, %v71
    %v73 = vrot.slane %v23, %v72
    %v74 = vmul.f32 %v68, %v73
    %v75 = vadd.f32 %v63, %v74
    %76 = vset.pattern.permute.xlu0 1
    %77 = vperm.xlu0 %76, %v57
    %v78 = vpop.permute.xlu0 %77
    %v80 = vlaneseq
    %v81 = vshrl.u32 %v80, 7
    %v82 = vsub.s32 1, %v81
    %v83 = vrot.slane %v23, %v82
    %v84 = vmul.f32 %v78, %v83
    %v85 = vadd.f32 %v75, %v84
    %86 = vset.pattern.permute.xlu0 2
    %87 = vperm.xlu0 %86, %v57
    %v88 = vpop.permute.xlu0 %87
    %v90 = vlaneseq
    %v91 = vshrl.u32 %v90, 7
    %v92 = vsub.s32 2, %v91
    %v93 = vrot.slane %v23, %v92
    %v94 = vmul.f32 %v88, %v93
    %v95 = vadd.f32 %v85, %v94
    %96 = vset.pattern.permute.xlu0 3
    %97 = vperm.xlu0 %96, %v57
    %v98 = vpop.permute.xlu0 %97
    %v100 = vlaneseq
    %v101 = vshrl.u32 %v100, 7
    %v102 = vsub.s32 3, %v101
    %v103 = vrot.slane %v23, %v102
    %v104 = vmul.f32 %v98, %v103
    %v105 = vadd.f32 %v95, %v104
    %v106 = vxor.u32 %v105, 2147483648
    %v107 = vmul.f32 %v106, 1.442695
    %v108 = vpow.pop %v107
    %v109 = vadd.f32 %v108, 1.0
    %v110 = vrcp.pop %v109
    %v111 = vmul.f32 1.0, %v110
    %112 = vst [vmem:[#allocation2] sm:$0xff] %v111
    // Predicated region
    $region22: #{tpu_custom_call.1} parent=1 // pred_check
      _
    $region23: #{tpu_custom_call.1} parent=1 // pred_check_branch
      %114 = sbr.rel (0) target = $region25
    $region24: #{tpu_custom_call.1} parent=1 // pred_region
      %s116 = ssub.s32 128, 128
      %117 = vsyncadd [#allocation3], %s116
      %s119 = sshll.u32 [#allocation2], 4
      %s120 = int_to_ptr.vmem [resolvable:$true] %s119
      %122 = dma.vmem_to_hbm [thread:$0]  %s120, 128, %s5, [#allocation3]
    $region25: #{tpu_custom_call.1} parent=1 // pred_fallthru
      _
    // Predicated region
    $region26: #{tpu_custom_call.1} parent=1 // pred_check
      _
    $region27: #{tpu_custom_call.1} parent=1 // pred_check_branch
      %124 = sbr.rel (0) target = $region29
    $region28: #{tpu_custom_call.1} parent=1 // pred_region
      %125 = dma.done [#allocation3], 128
    $region29: #{tpu_custom_call.1} parent=1 // pred_fallthru
      _
    %126 = vsyncpa [#allocation3], 1

</llo_original>
